<compile_context>
chip_gen: v6e
topology: v6e:2x2x1
jax: 0.10.0
libtpu: 0.0.40
codegen_flags: <defaults>
</compile_context>

<pallas_src>
import functools

import numpy as np
import jax
import jax.numpy as jnp
from jax.experimental import pallas as pl
from jax.experimental.pallas import tpu as pltpu


def wavenet_kernel(xT_ref, w1_ref, b1_ref, w2_ref, b2_ref, w3_ref, b3_ref,
                   o_ref, *, act_dtype):
    # fc1 + tanh : (64, 3) @ (3, bm) -> (64, bm).  f32 MXU accumulation; the
    # pre-activation is cast to act_dtype so the tanh runs at the bf16 EUP
    # rate when the bf16 path is enabled (the cast is a no-op for f32).
    z1 = jnp.dot(w1_ref[...], xT_ref[...],
                 preferred_element_type=jnp.float32) + b1_ref[...]
    h1 = jnp.tanh(z1.astype(act_dtype))
    # fc2 + tanh : (32, 64) @ (64, bm) -> (32, bm)
    z2 = jnp.dot(w2_ref[...], h1,
                 preferred_element_type=jnp.float32) + b2_ref[...]
    h2 = jnp.tanh(z2.astype(act_dtype))
    # fc3 + tanh : (1, 32) @ (32, bm) -> (1, bm)  -- lane-dense output store
    z3 = jnp.dot(w3_ref[...], h2,
                 preferred_element_type=jnp.float32) + b3_ref[...]
    o_ref[...] = jnp.tanh(z3.astype(act_dtype)).astype(o_ref.dtype)


def _choose_bm(B):
    """Batch tile heuristic.

    Big tiles amortize the ~0.35us/grid-step overhead; keeping >= 2 steps
    (when B allows) lets the "parallel" batch axis shard across v7x's two
    TensorCores and keeps the DMA pipeline full.  The 8192 cap keeps the f32
    intermediates + double-buffered I/O far inside v5e's 16 MiB default
    scoped-VMEM budget.
    """
    BM_MIN, BM_MAX = 256, 8192
    half = (B + 1) // 2
    half = ((half + 127) // 128) * 128       # ceil(B/2) rounded up to 128 lanes
    return int(max(BM_MIN, min(BM_MAX, half)))


@functools.partial(jax.jit, static_argnames=("bm", "use_bf16"))
def _wavenet_forward_impl(x, params, *, bm, use_bf16):
    B, D_in = x.shape
    w1, b1 = params["w1"], params["b1"]
    w2, b2 = params["w2"], params["b2"]
    w3, b3 = params["w3"], params["b3"]
    d1, d2, d_out = w1.shape[0], w2.shape[0], w3.shape[0]

    act_dtype = jnp.bfloat16 if use_bf16 else jnp.float32

    # Batch-in-lanes layout; pad batch up to a multiple of the tile so callers
    # have no divisibility constraint.  Under jit the transpose + pad fuse.
    Bp = pl.cdiv(B, bm) * bm
    xT = x.T                                   # (3, B)
    if Bp != B:
        xT = jnp.pad(xT, ((0, 0), (0, Bp - B)))
    if use_bf16:
        # Halve the xT DMA / VMEM and feed the MXU bf16 (f32 accumulation
        # preserved inside the kernel).  Accuracy-relaxing; v6e/v7x only.
        xT = xT.astype(jnp.bfloat16)
        w1 = w1.astype(jnp.bfloat16)
        w2 = w2.astype(jnp.bfloat16)
        w3 = w3.astype(jnp.bfloat16)

    full = lambda arr: pl.BlockSpec(arr.shape, lambda i: (0, 0))

    cost = pl.CostEstimate(
        flops=int(2 * Bp * (D_in * d1 + d1 * d2 + d2 * d_out)),
        transcendentals=int(Bp * (d1 + d2 + d_out)),
        bytes_accessed=int(
            xT.dtype.itemsize * D_in * Bp
            + 4 * d_out * Bp
            + w1.dtype.itemsize * (w1.size + w2.size + w3.size)
            + 4 * (b1.size + b2.size + b3.size)
        ),
    )

    outT = pl.pallas_call(
        functools.partial(wavenet_kernel, act_dtype=act_dtype),
        out_shape=jax.ShapeDtypeStruct((d_out, Bp), jnp.float32),
        grid=(Bp // bm,),
        in_specs=[
            pl.BlockSpec((D_in, bm), lambda i: (0, i)),   # x^T, tiled over batch lanes
            full(w1), full(b1),                           # resident weight/bias blocks
            full(w2), full(b2),
            full(w3), full(b3),
        ],
        out_specs=pl.BlockSpec((d_out, bm), lambda i: (0, i)),
        compiler_params=pltpu.CompilerParams(
            dimension_semantics=("parallel",),
            vmem_limit_bytes=32 * 1024 * 1024,
        ),
        cost_estimate=cost,
    )(xT, w1, b1, w2, b2, w3, b3)

    # Back to the PyTorch (B, 1) convention; drop batch padding.
    return outT.T[:B]


def wavenet_forward(x, params, *, bm=None, use_bf16=False):
    """x: (B, 3) float32.  params: weights (out, in) and biases (out, 1)."""
    if bm is None:
        bm = _choose_bm(x.shape[0])
    assert bm % 128 == 0, "batch tile must be a multiple of 128 lanes"
    return _wavenet_forward_impl(x, params, bm=bm, use_bf16=use_bf16)


def xavier_uniform(key, fan_out, fan_in):
    # matches torch.nn.init.xavier_uniform_ (gain=1) on a (out, in) weight
    limit = np.sqrt(6.0 / (fan_in + fan_out))
    return jax.random.uniform(
        key, (fan_out, fan_in), dtype=jnp.float32, minval=-limit, maxval=limit
    )


def init_params(key):
    k1, k2, k3 = jax.random.split(key, 3)
    return {
        "w1": xavier_uniform(k1, 64, 3),
        "b1": jnp.full((64, 1), 0.001, dtype=jnp.float32),
        "w2": xavier_uniform(k2, 32, 64),
        "b2": jnp.full((32, 1), 0.001, dtype=jnp.float32),
        "w3": xavier_uniform(k3, 1, 32),
        "b3": jnp.full((1, 1), 0.001, dtype=jnp.float32),
    }


def reference_forward(x, params):
    h = jnp.tanh(x @ params["w1"].T + params["b1"].T)
    h = jnp.tanh(h @ params["w2"].T + params["b2"].T)
    return jnp.tanh(h @ params["w3"].T + params["b3"].T)


if __name__ == "__main__":
    key = jax.random.PRNGKey(0)
    kp, kx = jax.random.split(key)
    params = init_params(kp)

    # 1) Small deterministic test (single tile, adaptive bm).
    B = 16
    x = jax.random.normal(kx, (B, 3), dtype=jnp.float32)
    out = jax.block_until_ready(wavenet_forward(x, params))
    ref = reference_forward(x, params)
    np.testing.assert_allclose(np.asarray(out), np.asarray(ref), rtol=1e-5, atol=1e-5)

    # 2) Ragged batch + explicit small tile -> 2-step grid with padding.
    B2 = 300
    x2 = jax.random.normal(jax.random.PRNGKey(1), (B2, 3), dtype=jnp.float32)
    out2 = jax.block_until_ready(wavenet_forward(x2, params, bm=256))
    ref2 = reference_forward(x2, params)
    np.testing.assert_allclose(np.asarray(out2), np.asarray(ref2), rtol=1e-5, atol=1e-5)

    # 3) Adaptive tile on a moderate batch: bm=1280, 2 grid steps (megacore-friendly).
    B3 = 2500
    x3 = jax.random.normal(jax.random.PRNGKey(2), (B3, 3), dtype=jnp.float32)
    out3 = jax.block_until_ready(wavenet_forward(x3, params))
    ref3 = reference_forward(x3, params)
    np.testing.assert_allclose(np.asarray(out3), np.asarray(ref3), rtol=1e-5, atol=1e-5)

    # 4) Opt-in bf16 activation/tanh path (accuracy-relaxing; loose tolerance).
    out_bf16 = jax.block_until_ready(wavenet_forward(x2, params, use_bf16=True))
    np.testing.assert_allclose(
        np.asarray(out_bf16), np.asarray(ref2), rtol=5e-2, atol=5e-2
    )

    print("KERNEL_OK")
</pallas_src>

<mosaic_0001>
module attributes {stable_mosaic.version = 11 : i64} {
  func.func @wavenet_kernel(%arg0: i32, %arg1: memref<3x256xf32, #tpu.memory_space<vmem>>, %arg2: memref<64x3xf32, #tpu.memory_space<vmem>>, %arg3: memref<64x1xf32, #tpu.memory_space<vmem>>, %arg4: memref<32x64xf32, #tpu.memory_space<vmem>>, %arg5: memref<32x1xf32, #tpu.memory_space<vmem>>, %arg6: memref<1x32xf32, #tpu.memory_space<vmem>>, %arg7: memref<1x1xf32, #tpu.memory_space<vmem>>, %arg8: memref<1x256xf32, #tpu.memory_space<vmem>>) attributes {dimension_semantics = [#tpu.dimension_semantics<parallel>], iteration_bounds = array<i64: 1>, scalar_prefetch = 0 : i64, scratch_operands = 0 : i64, tpu.core_type = #tpu.core_type<tc>, window_params = [{transform_indices = @transform_0, window_bounds = array<i64: 3, 256>}, {pipeline_mode = #tpu.pipeline_mode<synchronous>, transform_indices = @transform_1, window_bounds = array<i64: 64, 3>}, {pipeline_mode = #tpu.pipeline_mode<synchronous>, transform_indices = @transform_2, window_bounds = array<i64: 64, 1>}, {pipeline_mode = #tpu.pipeline_mode<synchronous>, transform_indices = @transform_3, window_bounds = array<i64: 32, 64>}, {pipeline_mode = #tpu.pipeline_mode<synchronous>, transform_indices = @transform_4, window_bounds = array<i64: 32, 1>}, {pipeline_mode = #tpu.pipeline_mode<synchronous>, transform_indices = @transform_5, window_bounds = array<i64: 1, 32>}, {pipeline_mode = #tpu.pipeline_mode<synchronous>, transform_indices = @transform_6, window_bounds = array<i64: 1, 1>}, {transform_indices = @transform_7, window_bounds = array<i64: 1, 256>}]} {
    %c0 = arith.constant 0 : index
    %c0_0 = arith.constant 0 : index
    %0 = vector.load %arg2[%c0, %c0_0] : memref<64x3xf32, #tpu.memory_space<vmem>>, vector<64x3xf32>
    %c0_1 = arith.constant 0 : index
    %c0_2 = arith.constant 0 : index
    %1 = vector.load %arg1[%c0_1, %c0_2] : memref<3x256xf32, #tpu.memory_space<vmem>>, vector<3x256xf32>
    %cst = arith.constant dense<0.000000e+00> : vector<64x256xf32>
    %2 = tpu.matmul %0, %1, %cst {dimension_numbers = #tpu.dot_dimension_numbers<[1], [0], [0], [1], [0, 0, 1, 1], [], []>} : vector<64x3xf32>, vector<3x256xf32>, vector<64x256xf32> -> vector<64x256xf32>
    %c0_3 = arith.constant 0 : index
    %c0_4 = arith.constant 0 : index
    %3 = vector.load %arg3[%c0_3, %c0_4] : memref<64x1xf32, #tpu.memory_space<vmem>>, vector<64x1xf32>
    %4 = vector.broadcast %3 : vector<64x1xf32> to vector<64x256xf32>
    %5 = arith.addf %2, %4 : vector<64x256xf32>
    %6 = math.tanh %5 : vector<64x256xf32>
    %c0_5 = arith.constant 0 : index
    %c0_6 = arith.constant 0 : index
    %7 = vector.load %arg4[%c0_5, %c0_6] : memref<32x64xf32, #tpu.memory_space<vmem>>, vector<32x64xf32>
    %cst_7 = arith.constant dense<0.000000e+00> : vector<32x256xf32>
    %8 = tpu.matmul %7, %6, %cst_7 {dimension_numbers = #tpu.dot_dimension_numbers<[1], [0], [0], [1], [0, 0, 1, 1], [], []>} : vector<32x64xf32>, vector<64x256xf32>, vector<32x256xf32> -> vector<32x256xf32>
    %c0_8 = arith.constant 0 : index
    %c0_9 = arith.constant 0 : index
    %9 = vector.load %arg5[%c0_8, %c0_9] : memref<32x1xf32, #tpu.memory_space<vmem>>, vector<32x1xf32>
    %10 = vector.broadcast %9 : vector<32x1xf32> to vector<32x256xf32>
    %11 = arith.addf %8, %10 : vector<32x256xf32>
    %12 = math.tanh %11 : vector<32x256xf32>
    %c0_10 = arith.constant 0 : index
    %c0_11 = arith.constant 0 : index
    %13 = vector.load %arg6[%c0_10, %c0_11] : memref<1x32xf32, #tpu.memory_space<vmem>>, vector<1x32xf32>
    %cst_12 = arith.constant dense<0.000000e+00> : vector<1x256xf32>
    %14 = tpu.matmul %13, %12, %cst_12 {dimension_numbers = #tpu.dot_dimension_numbers<[1], [0], [0], [1], [0, 0, 1, 1], [], []>} : vector<1x32xf32>, vector<32x256xf32>, vector<1x256xf32> -> vector<1x256xf32>
    %c0_13 = arith.constant 0 : index
    %c0_14 = arith.constant 0 : index
    %15 = vector.load %arg7[%c0_13, %c0_14] : memref<1x1xf32, #tpu.memory_space<vmem>>, vector<1x1xf32>
    %16 = vector.broadcast %15 : vector<1x1xf32> to vector<1x256xf32>
    %17 = arith.addf %14, %16 : vector<1x256xf32>
    %18 = math.tanh %17 : vector<1x256xf32>
    %c0_15 = arith.constant 0 : index
    %c0_16 = arith.constant 0 : index
    %19 = vector.load %arg8[%c0_15, %c0_16] : memref<1x256xf32, #tpu.memory_space<vmem>>, vector<1x256xf32>
    tpu.vector_store %arg8[%c0_15, %c0_16], %18 {strides = array<i32>} : memref<1x256xf32, #tpu.memory_space<vmem>>, vector<1x256xf32>,
    return
  }
  func.func @transform_0(%arg0: i32) -> (i32, i32) {
    %c0_i32 = arith.constant 0 : i32
    %c0_i32_0 = arith.constant 0 : i32
    return %c0_i32, %arg0 : i32, i32
  }
  func.func @transform_1(%arg0: i32) -> (i32, i32) {
    %c0_i32 = arith.constant 0 : i32
    %c0_i32_0 = arith.constant 0 : i32
    %c0_i32_1 = arith.constant 0 : i32
    return %c0_i32, %c0_i32_0 : i32, i32
  }
  func.func @transform_2(%arg0: i32) -> (i32, i32) {
    %c0_i32 = arith.constant 0 : i32
    %c0_i32_0 = arith.constant 0 : i32
    %c0_i32_1 = arith.constant 0 : i32
    return %c0_i32, %c0_i32_0 : i32, i32
  }
  func.func @transform_3(%arg0: i32) -> (i32, i32) {
    %c0_i32 = arith.constant 0 : i32
    %c0_i32_0 = arith.constant 0 : i32
    %c0_i32_1 = arith.constant 0 : i32
    return %c0_i32, %c0_i32_0 : i32, i32
  }
  func.func @transform_4(%arg0: i32) -> (i32, i32) {
    %c0_i32 = arith.constant 0 : i32
    %c0_i32_0 = arith.constant 0 : i32
    %c0_i32_1 = arith.constant 0 : i32
    return %c0_i32, %c0_i32_0 : i32, i32
  }
  func.func @transform_5(%arg0: i32) -> (i32, i32) {
    %c0_i32 = arith.constant 0 : i32
    %c0_i32_0 = arith.constant 0 : i32
    %c0_i32_1 = arith.constant 0 : i32
    return %c0_i32, %c0_i32_0 : i32, i32
  }
  func.func @transform_6(%arg0: i32) -> (i32, i32) {
    %c0_i32 = arith.constant 0 : i32
    %c0_i32_0 = arith.constant 0 : i32
    %c0_i32_1 = arith.constant 0 : i32
    return %c0_i32, %c0_i32_0 : i32, i32
  }
  func.func @transform_7(%arg0: i32) -> (i32, i32) {
    %c0_i32 = arith.constant 0 : i32
    %c0_i32_0 = arith.constant 0 : i32
    return %c0_i32, %arg0 : i32, i32
  }
}

</mosaic_0001>

<llo_original>
// kernel: _wavenet_forward_impl.1
$region0: #{_wavenet_forward_impl.1}
  #allocation0 [shape = 'u32[]', space=smem, size = 0x4, offset = 0x4, fixed_abs, tag = 'smem constant byte address 0x4 - core index']
  #allocation1 [shape = 'u32[144,128]{1,0:T(1,128)}', space=vmem, size = 0x12000, scoped, tag = 'internal scratch']
  #allocation2 [shape = 'f32[1,1]{1,0:T(1,128)S(1)}', space=vmem, size = 0x200, scoped, tag = 'scoped memory for _wavenet_forward_impl.1']
  %s0 = inlined_call_operand.vmem [shape: f32[3,256], index: 0, kind: input, shape index: {}]
  %s1 = inlined_call_operand.vmem [shape: f32[64,3], index: 1, kind: input, shape index: {}]
  %s2 = inlined_call_operand.vmem [shape: f32[64,1], index: 2, kind: input, shape index: {}]
  %s3 = inlined_call_operand.vmem [shape: f32[32,64], index: 3, kind: input, shape index: {}]
  %s4 = inlined_call_operand.vmem [shape: f32[32,1], index: 4, kind: input, shape index: {}]
  %s5 = inlined_call_operand.vmem [shape: f32[1,32], index: 5, kind: input, shape index: {}]
  %s6 = inlined_call_operand.<no memory space> [shape: f32[1,1], index: 6, kind: input, shape index: {}]
  %s7 = inlined_call_operand.vmem [shape: f32[1,256], index: 7, kind: output, shape index: {}]
  %s8 = sld [smem:[#allocation0]]
  $region38: #{_wavenet_forward_impl.1} parent=0
    _
  %s10 = ssub.s32 1, %s8
  %s11 = scalar_select 0, %s10, %s8
  %v12 = vstv %s6
  %13 = vst [vmem:[#allocation2] sm:$0x1] %v12
  // Predicated region
  $region2: #{_wavenet_forward_impl.1} parent=0 // pred_check
    _
  $region3: #{_wavenet_forward_impl.1} parent=0 // pred_check_branch
    %15 = sbr.rel (0) target = $region5
  $region4: #{_wavenet_forward_impl.1} parent=0 // pred_region
    _
  $region5: #{_wavenet_forward_impl.1} parent=0 // pred_fallthru
    _
  // Predicated region
  $region6: #{_wavenet_forward_impl.1} parent=0 // pred_check
    _
  $region7: #{_wavenet_forward_impl.1} parent=0 // pred_check_branch
    %17 = sbr.rel (0) target = $region9
  $region8: #{_wavenet_forward_impl.1} parent=0 // pred_region
    _
  $region9: #{_wavenet_forward_impl.1} parent=0 // pred_fallthru
    _
  // Predicated region
  $region10: #{_wavenet_forward_impl.1} parent=0 // pred_check
    _
  $region11: #{_wavenet_forward_impl.1} parent=0 // pred_check_branch
    %19 = sbr.rel (0) target = $region13
  $region12: #{_wavenet_forward_impl.1} parent=0 // pred_region
    _
  $region13: #{_wavenet_forward_impl.1} parent=0 // pred_fallthru
    _
  // Predicated region
  $region14: #{_wavenet_forward_impl.1} parent=0 // pred_check
    _
  $region15: #{_wavenet_forward_impl.1} parent=0 // pred_check_branch
    %21 = sbr.rel (0) target = $region17
  $region16: #{_wavenet_forward_impl.1} parent=0 // pred_region
    _
  $region17: #{_wavenet_forward_impl.1} parent=0 // pred_fallthru
    _
  // Predicated region
  $region18: #{_wavenet_forward_impl.1} parent=0 // pred_check
    _
  $region19: #{_wavenet_forward_impl.1} parent=0 // pred_check_branch
    %23 = sbr.rel (0) target = $region21
  $region20: #{_wavenet_forward_impl.1} parent=0 // pred_region
    _
  $region21: #{_wavenet_forward_impl.1} parent=0 // pred_fallthru
    _
  // Predicated region
  $region22: #{_wavenet_forward_impl.1} parent=0 // pred_check
    _
  $region23: #{_wavenet_forward_impl.1} parent=0 // pred_check_branch
    %25 = sbr.rel (0) target = $region25
  $region24: #{_wavenet_forward_impl.1} parent=0 // pred_region
    _
  $region25: #{_wavenet_forward_impl.1} parent=0 // pred_fallthru
    _
  // Predicated region
  $region26: #{_wavenet_forward_impl.1} parent=0 // pred_check
    _
  $region27: #{_wavenet_forward_impl.1} parent=0 // pred_check_branch
    %27 = sbr.rel (0) target = $region29
  $region28: #{_wavenet_forward_impl.1} parent=0 // pred_region
    _
  $region29: #{_wavenet_forward_impl.1} parent=0 // pred_fallthru
    _
  %v28 = vld [vmem:[%s1] sm:$0xff]
  %v29 = vld [vmem:[%s1 + $0x8] sm:$0xff]
  %v30 = vld [vmem:[%s1 + $0x10] sm:$0xff]
  %v31 = vld [vmem:[%s1 + $0x18] sm:$0xff]
  %v32 = vld [vmem:[%s1 + $0x20] sm:$0xff]
  %v33 = vld [vmem:[%s1 + $0x28] sm:$0xff]
  %v34 = vld [vmem:[%s1 + $0x30] sm:$0xff]
  %v35 = vld [vmem:[%s1 + $0x38] sm:$0xff]
  %v36 = vld [vmem:[%s0] sm:$0x77]
  %v37 = vld [vmem:[%s2] sm:$0xff]
  %v38 = vld [vmem:[%s2 + $0x8] sm:$0xff]
  %v39 = vld [vmem:[%s2 + $0x10] sm:$0xff]
  %v40 = vld [vmem:[%s2 + $0x18] sm:$0xff]
  %v41 = vld [vmem:[%s2 + $0x20] sm:$0xff]
  %v42 = vld [vmem:[%s2 + $0x28] sm:$0xff]
  %v43 = vld [vmem:[%s2 + $0x30] sm:$0xff]
  %v44 = vld [vmem:[%s2 + $0x38] sm:$0xff]
  %46 = vset.pattern.permute.xlu0 0
  %47 = vperm.xlu0 %46, %v37
  %v48 = vpop.permute.xlu0 %47
  %51 = vset.pattern.permute.xlu0 0
  %52 = vperm.xlu0 %51, %v38
  %v53 = vpop.permute.xlu0 %52
  %56 = vset.pattern.permute.xlu0 0
  %57 = vperm.xlu0 %56, %v39
  %v58 = vpop.permute.xlu0 %57
  %61 = vset.pattern.permute.xlu0 0
  %62 = vperm.xlu0 %61, %v40
  %v63 = vpop.permute.xlu0 %62
  %66 = vset.pattern.permute.xlu0 0
  %67 = vperm.xlu0 %66, %v41
  %v68 = vpop.permute.xlu0 %67
  %71 = vset.pattern.permute.xlu0 0
  %72 = vperm.xlu0 %71, %v42
  %v73 = vpop.permute.xlu0 %72
  %76 = vset.pattern.permute.xlu0 0
  %77 = vperm.xlu0 %76, %v43
  %v78 = vpop.permute.xlu0 %77
  %81 = vset.pattern.permute.xlu0 0
  %82 = vperm.xlu0 %81, %v44
  %v83 = vpop.permute.xlu0 %82
  %v86 = vcombine.high %v36, %v36
  %vm87 = vcmask 23552
  %v89 = vsel %vm87, %v28, 0
  %v92 = vsel %vm87, %v29, 0
  %v95 = vsel %vm87, %v30, 0
  %v98 = vsel %vm87, %v31, 0
  %v101 = vsel %vm87, %v32, 0
  %v104 = vsel %vm87, %v33, 0
  %v107 = vsel %vm87, %v34, 0
  %v110 = vsel %vm87, %v35, 0
  %vm112 = vcmask 1042432
  %v113 = vsel %vm112, %v36, 0
  %v115 = vsel %vm112, %v86, 0
  %117 = vmatprep.subr.mxu0 0.0
  %118 = vmatpush1.msra.mxu0 0.0
  %119 = vmatprep.subr.mxu0 0.0
  %120 = vmatpush1.msra.mxu0 0.0
  %121 = vmatprep.subr.mxu0 0.0
  %122 = vmatpush1.msra.mxu0 0.0
  %123 = vmatprep.subr.mxu0 0.0
  %124 = vmatpush1.msra.mxu0 0.0
  %125 = vmatprep.subr.mxu0 0.0
  %126 = vmatpush1.msra.mxu0 0.0
  %127 = vmatprep.subr.mxu0 0.0
  %128 = vmatpush1.msra.mxu0 0.0
  %129 = vmatprep.subr.mxu0 0.0
  %130 = vmatpush1.msra.mxu0 0.0
  %131 = vmatprep.subr.mxu0 0.0
  %132 = vmatpush1.msra.mxu0 0.0
  %133 = vmatprep.subr.mxu0 0.0
  %134 = vmatpush1.msra.mxu0 0.0
  %135 = vmatprep.subr.mxu0 0.0
  %136 = vmatpush1.msra.mxu0 0.0
  %137 = vmatprep.subr.mxu0 0.0
  %138 = vmatpush1.msra.mxu0 0.0
  %139 = vmatprep.subr.mxu0 0.0
  %140 = vmatpush1.msra.mxu0 0.0
  %141 = vmatprep.subr.mxu0 0.0
  %142 = vmatpush1.msra.mxu0 0.0
  %143 = vmatprep.subr.mxu0 0.0
  %144 = vmatpush1.msra.mxu0 0.0
  %145 = vmatprep.subr.mxu0 0.0
  %146 = vmatpush1.msra.mxu0 0.0
  %147 = vmatprep.subr.mxu0 %v115
  %148 = vmatpush1.msra.mxu0 %v113
  %149 = vmatprep.subr.mxu0 0.0
  %150 = vmatpush2.msra.mxu0 0.0
  %151 = vmatprep.subr.mxu0 0.0
  %152 = vmatpush2.msra.mxu0 0.0
  %153 = vmatprep.subr.mxu0 0.0
  %154 = vmatpush2.msra.mxu0 0.0
  %155 = vmatprep.subr.mxu0 0.0
  %156 = vmatpush2.msra.mxu0 0.0
  %157 = vmatprep.subr.mxu0 0.0
  %158 = vmatpush2.msra.mxu0 0.0
  %159 = vmatprep.subr.mxu0 0.0
  %160 = vmatpush2.msra.mxu0 0.0
  %161 = vmatprep.subr.mxu0 0.0
  %162 = vmatpush2.msra.mxu0 0.0
  %163 = vmatprep.subr.mxu0 0.0
  %164 = vmatpush2.msra.mxu0 0.0
  %165 = vmatprep.subr.mxu0 0.0
  %166 = vmatpush2.msra.mxu0 0.0
  %167 = vmatprep.subr.mxu0 0.0
  %168 = vmatpush2.msra.mxu0 0.0
  %169 = vmatprep.subr.mxu0 0.0
  %170 = vmatpush2.msra.mxu0 0.0
  %171 = vmatprep.subr.mxu0 0.0
  %172 = vmatpush2.msra.mxu0 0.0
  %173 = vmatprep.subr.mxu0 0.0
  %174 = vmatpush2.msra.mxu0 0.0
  %175 = vmatprep.subr.mxu0 0.0
  %176 = vmatpush2.msra.mxu0 0.0
  %177 = vmatprep.subr.mxu0 0.0
  %178 = vmatpush2.msra.mxu0 0.0
  %179 = vmatprep.subr.mxu0 0.0
  %180 = vmatpush2.msra.mxu0 0.0
  %181 = vmatprep.mubr.f32.mxu0 0.0
  %182 = vmatmul.mubr.f32.gmra.mxu0 %v89
  %v183 = vpop.f32.mrf.mxu0
  %v184 = vadd.f32 %v48, %v183
  %v185 = vpop.f32.mrf.mxu0
  %v186 = vadd.f32 %v48, %v185
  %187 = vmatprep.mubr.f32.mxu0 0.0
  %188 = vmatmul.mubr.f32.gmra.mxu0 %v92
  %v189 = vpop.f32.mrf.mxu0
  %v190 = vadd.f32 %v53, %v189
  %v191 = vpop.f32.mrf.mxu0
  %v192 = vadd.f32 %v53, %v191
  %193 = vmatprep.mubr.f32.mxu0 0.0
  %194 = vmatmul.mubr.f32.gmra.mxu0 %v95
  %v195 = vpop.f32.mrf.mxu0
  %v196 = vadd.f32 %v58, %v195
  %v197 = vpop.f32.mrf.mxu0
  %v198 = vadd.f32 %v58, %v197
  %199 = vmatprep.mubr.f32.mxu0 0.0
  %200 = vmatmul.mubr.f32.gmra.mxu0 %v98
  %v201 = vpop.f32.mrf.mxu0
  %v202 = vadd.f32 %v63, %v201
  %v203 = vpop.f32.mrf.mxu0
  %v204 = vadd.f32 %v63, %v203
  %205 = vmatprep.mubr.f32.mxu0 0.0
  %206 = vmatmul.mubr.f32.gmra.mxu0 %v101
  %v207 = vpop.f32.mrf.mxu0
  %v208 = vadd.f32 %v68, %v207
  %v209 = vpop.f32.mrf.mxu0
  %v210 = vadd.f32 %v68, %v209
  %211 = vmatprep.mubr.f32.mxu0 0.0
  %212 = vmatmul.mubr.f32.gmra.mxu0 %v104
  %v213 = vpop.f32.mrf.mxu0
  %v214 = vadd.f32 %v73, %v213
  %v215 = vpop.f32.mrf.mxu0
  %v216 = vadd.f32 %v73, %v215
  %217 = vmatprep.mubr.f32.mxu0 0.0
  %218 = vmatmul.mubr.f32.gmra.mxu0 %v107
  %v219 = vpop.f32.mrf.mxu0
  %v220 = vadd.f32 %v78, %v219
  %v221 = vpop.f32.mrf.mxu0
  %v222 = vadd.f32 %v78, %v221
  %223 = vmatprep.mubr.f32.mxu0 0.0
  %224 = vmatmul.mubr.f32.gmra.mxu0 %v110
  %v225 = vpop.f32.mrf.mxu0
  %v226 = vadd.f32 %v83, %v225
  %v227 = vpop.f32.mrf.mxu0
  %v228 = vadd.f32 %v83, %v227
  %229 = vdwg.mxu0
  %v230 = vtanh.pop %v184
  %v231 = vtanh.pop %v186
  %v232 = vtanh.pop %v190
  %v233 = vtanh.pop %v192
  %v234 = vtanh.pop %v196
  %v235 = vtanh.pop %v198
  %v236 = vtanh.pop %v202
  %v237 = vtanh.pop %v204
  %v238 = vtanh.pop %v208
  %v239 = vtanh.pop %v210
  %v240 = vtanh.pop %v214
  %v241 = vtanh.pop %v216
  %v242 = vtanh.pop %v220
  %v243 = vtanh.pop %v222
  %v244 = vtanh.pop %v226
  %v245 = vtanh.pop %v228
  %v246 = vld [vmem:[%s3] sm:$0xff]
  %v247 = vld [vmem:[%s3 + $0x8] sm:$0xff]
  %v248 = vld [vmem:[%s3 + $0x10] sm:$0xff]
  %v249 = vld [vmem:[%s3 + $0x18] sm:$0xff]
  %v250 = vld [vmem:[%s4] sm:$0xff]
  %v251 = vld [vmem:[%s4 + $0x8] sm:$0xff]
  %v252 = vld [vmem:[%s4 + $0x10] sm:$0xff]
  %v253 = vld [vmem:[%s4 + $0x18] sm:$0xff]
  %255 = vset.pattern.permute.xlu0 0
  %256 = vperm.xlu0 %255, %v250
  %v257 = vpop.permute.xlu0 %256
  %260 = vset.pattern.permute.xlu0 0
  %261 = vperm.xlu0 %260, %v251
  %v262 = vpop.permute.xlu0 %261
  %265 = vset.pattern.permute.xlu0 0
  %266 = vperm.xlu0 %265, %v252
  %v267 = vpop.permute.xlu0 %266
  %270 = vset.pattern.permute.xlu0 0
  %271 = vperm.xlu0 %270, %v253
  %v272 = vpop.permute.xlu0 %271
  %vm274 = vcmask 523264
  %v276 = vsel %vm274, %v246, 0
  %v279 = vsel %vm274, %v247, 0
  %v282 = vsel %vm274, %v248, 0
  %v285 = vsel %vm274, %v249, 0
  %287 = vmatprep.subr.mxu0 0.0
  %288 = vmatpush1.msra.mxu0 0.0
  %289 = vmatprep.subr.mxu0 0.0
  %290 = vmatpush1.msra.mxu0 0.0
  %291 = vmatprep.subr.mxu0 0.0
  %292 = vmatpush1.msra.mxu0 0.0
  %293 = vmatprep.subr.mxu0 0.0
  %294 = vmatpush1.msra.mxu0 0.0
  %295 = vmatprep.subr.mxu0 0.0
  %296 = vmatpush1.msra.mxu0 0.0
  %297 = vmatprep.subr.mxu0 0.0
  %298 = vmatpush1.msra.mxu0 0.0
  %299 = vmatprep.subr.mxu0 0.0
  %300 = vmatpush1.msra.mxu0 0.0
  %301 = vmatprep.subr.mxu0 0.0
  %302 = vmatpush1.msra.mxu0 0.0
  %303 = vmatprep.subr.mxu0 %v245
  %304 = vmatpush1.msra.mxu0 %v244
  %305 = vmatprep.subr.mxu0 %v243
  %306 = vmatpush1.msra.mxu0 %v242
  %307 = vmatprep.subr.mxu0 %v241
  %308 = vmatpush1.msra.mxu0 %v240
  %309 = vmatprep.subr.mxu0 %v239
  %310 = vmatpush1.msra.mxu0 %v238
  %311 = vmatprep.subr.mxu0 %v237
  %312 = vmatpush1.msra.mxu0 %v236
  %313 = vmatprep.subr.mxu0 %v235
  %314 = vmatpush1.msra.mxu0 %v234
  %315 = vmatprep.subr.mxu0 %v233
  %316 = vmatpush1.msra.mxu0 %v232
  %317 = vmatprep.subr.mxu0 %v231
  %318 = vmatpush1.msra.mxu0 %v230
  %319 = vmatprep.subr.mxu0 0.0
  %320 = vmatpush2.msra.mxu0 0.0
  %321 = vmatprep.subr.mxu0 0.0
  %322 = vmatpush2.msra.mxu0 0.0
  %323 = vmatprep.subr.mxu0 0.0
  %324 = vmatpush2.msra.mxu0 0.0
  %325 = vmatprep.subr.mxu0 0.0
  %326 = vmatpush2.msra.mxu0 0.0
  %327 = vmatprep.subr.mxu0 0.0
  %328 = vmatpush2.msra.mxu0 0.0
  %329 = vmatprep.subr.mxu0 0.0
  %330 = vmatpush2.msra.mxu0 0.0
  %331 = vmatprep.subr.mxu0 0.0
  %332 = vmatpush2.msra.mxu0 0.0
  %333 = vmatprep.subr.mxu0 0.0
  %334 = vmatpush2.msra.mxu0 0.0
  %335 = vmatprep.subr.mxu0 0.0
  %336 = vmatpush2.msra.mxu0 0.0
  %337 = vmatprep.subr.mxu0 0.0
  %338 = vmatpush2.msra.mxu0 0.0
  %339 = vmatprep.subr.mxu0 0.0
  %340 = vmatpush2.msra.mxu0 0.0
  %341 = vmatprep.subr.mxu0 0.0
  %342 = vmatpush2.msra.mxu0 0.0
  %343 = vmatprep.subr.mxu0 0.0
  %344 = vmatpush2.msra.mxu0 0.0
  %345 = vmatprep.subr.mxu0 0.0
  %346 = vmatpush2.msra.mxu0 0.0
  %347 = vmatprep.subr.mxu0 0.0
  %348 = vmatpush2.msra.mxu0 0.0
  %349 = vmatprep.subr.mxu0 0.0
  %350 = vmatpush2.msra.mxu0 0.0
  %351 = vmatprep.mubr.f32.mxu0 0.0
  %352 = vmatmul.mubr.f32.gmra.mxu0 %v276
  %v353 = vpop.f32.mrf.mxu0
  %v354 = vadd.f32 %v257, %v353
  %v355 = vpop.f32.mrf.mxu0
  %v356 = vadd.f32 %v257, %v355
  %357 = vmatprep.mubr.f32.mxu0 0.0
  %358 = vmatmul.mubr.f32.gmra.mxu0 %v279
  %v359 = vpop.f32.mrf.mxu0
  %v360 = vadd.f32 %v262, %v359
  %v361 = vpop.f32.mrf.mxu0
  %v362 = vadd.f32 %v262, %v361
  %363 = vmatprep.mubr.f32.mxu0 0.0
  %364 = vmatmul.mubr.f32.gmra.mxu0 %v282
  %v365 = vpop.f32.mrf.mxu0
  %v366 = vadd.f32 %v267, %v365
  %v367 = vpop.f32.mrf.mxu0
  %v368 = vadd.f32 %v267, %v367
  %369 = vmatprep.mubr.f32.mxu0 0.0
  %370 = vmatmul.mubr.f32.gmra.mxu0 %v285
  %v371 = vpop.f32.mrf.mxu0
  %v372 = vadd.f32 %v272, %v371
  %v373 = vpop.f32.mrf.mxu0
  %v374 = vadd.f32 %v272, %v373
  %375 = vdwg.mxu0
  %v376 = vtanh.pop %v354
  %v377 = vtanh.pop %v356
  %v378 = vtanh.pop %v360
  %v379 = vtanh.pop %v362
  %v380 = vtanh.pop %v366
  %v381 = vtanh.pop %v368
  %v382 = vtanh.pop %v372
  %v383 = vtanh.pop %v374
  %v384 = vld [vmem:[%s5] sm:$0x1]
  %v385 = vld [vmem:[#allocation2] sm:$0x1]
  %387 = vset.pattern.permute.xlu0 0
  %388 = vperm.xlu0 %387, %v385
  %v389 = vpop.permute.xlu0 %388
  %v391 = vlaneseq
  %v392 = vshrl.u32 %v391, 7
  %v393 = vsub.s32 0, %v392
  %v394 = vrot.slane %v389, %v393
  %vm395 = vcmask 261120
  %v397 = vsel %vm395, %v384, 0
  %399 = vmatprep.subr.mxu0 0.0
  %400 = vmatpush1.msra.mxu0 0.0
  %401 = vmatprep.subr.mxu0 0.0
  %402 = vmatpush1.msra.mxu0 0.0
  %403 = vmatprep.subr.mxu0 0.0
  %404 = vmatpush1.msra.mxu0 0.0
  %405 = vmatprep.subr.mxu0 0.0
  %406 = vmatpush1.msra.mxu0 0.0
  %407 = vmatprep.subr.mxu0 0.0
  %408 = vmatpush1.msra.mxu0 0.0
  %409 = vmatprep.subr.mxu0 0.0
  %410 = vmatpush1.msra.mxu0 0.0
  %411 = vmatprep.subr.mxu0 0.0
  %412 = vmatpush1.msra.mxu0 0.0
  %413 = vmatprep.subr.mxu0 0.0
  %414 = vmatpush1.msra.mxu0 0.0
  %415 = vmatprep.subr.mxu0 0.0
  %416 = vmatpush1.msra.mxu0 0.0
  %417 = vmatprep.subr.mxu0 0.0
  %418 = vmatpush1.msra.mxu0 0.0
  %419 = vmatprep.subr.mxu0 0.0
  %420 = vmatpush1.msra.mxu0 0.0
  %421 = vmatprep.subr.mxu0 0.0
  %422 = vmatpush1.msra.mxu0 0.0
  %423 = vmatprep.subr.mxu0 %v383
  %424 = vmatpush1.msra.mxu0 %v382
  %425 = vmatprep.subr.mxu0 %v381
  %426 = vmatpush1.msra.mxu0 %v380
  %427 = vmatprep.subr.mxu0 %v379
  %428 = vmatpush1.msra.mxu0 %v378
  %429 = vmatprep.subr.mxu0 %v377
  %430 = vmatpush1.msra.mxu0 %v376
  %431 = vmatprep.subr.mxu0 0.0
  %432 = vmatpush2.msra.mxu0 0.0
  %433 = vmatprep.subr.mxu0 0.0
  %434 = vmatpush2.msra.mxu0 0.0
  %435 = vmatprep.subr.mxu0 0.0
  %436 = vmatpush2.msra.mxu0 0.0
  %437 = vmatprep.subr.mxu0 0.0
  %438 = vmatpush2.msra.mxu0 0.0
  %439 = vmatprep.subr.mxu0 0.0
  %440 = vmatpush2.msra.mxu0 0.0
  %441 = vmatprep.subr.mxu0 0.0
  %442 = vmatpush2.msra.mxu0 0.0
  %443 = vmatprep.subr.mxu0 0.0
  %444 = vmatpush2.msra.mxu0 0.0
  %445 = vmatprep.subr.mxu0 0.0
  %446 = vmatpush2.msra.mxu0 0.0
  %447 = vmatprep.subr.mxu0 0.0
  %448 = vmatpush2.msra.mxu0 0.0
  %449 = vmatprep.subr.mxu0 0.0
  %450 = vmatpush2.msra.mxu0 0.0
  %451 = vmatprep.subr.mxu0 0.0
  %452 = vmatpush2.msra.mxu0 0.0
  %453 = vmatprep.subr.mxu0 0.0
  %454 = vmatpush2.msra.mxu0 0.0
  %455 = vmatprep.subr.mxu0 0.0
  %456 = vmatpush2.msra.mxu0 0.0
  %457 = vmatprep.subr.mxu0 0.0
  %458 = vmatpush2.msra.mxu0 0.0
  %459 = vmatprep.subr.mxu0 0.0
  %460 = vmatpush2.msra.mxu0 0.0
  %461 = vmatprep.subr.mxu0 0.0
  %462 = vmatpush2.msra.mxu0 0.0
  %463 = vmatprep.mubr.f32.mxu0 0.0
  %464 = vmatmul.mubr.f32.gmra.mxu0 %v397
  %v465 = vpop.f32.mrf.mxu0
  %v466 = vadd.f32 %v394, %v465
  %v467 = vpop.f32.mrf.mxu0
  %v468 = vadd.f32 %v394, %v467
  %469 = vdwg.mxu0
  %v470 = vtanh.pop %v466
  %v471 = vtanh.pop %v468
  %v474 = vcombine.low %v470, %v471
  %v476 = vunpack.c.l.s4 1966171168
  %v477 = vunpack.c.0.s8 %v476
  %v478 = vlaneseq
  %v479 = vshrl.u32 %v478, 7
  %v480 = vsub.s32 %v477, %v479
  %v481 = vrot.slane %v474, %v480
  %v483 = vunpack.c.l.s4 1966171168
  %v484 = vunpack.c.0.s8 %v483
  %v485 = vlaneseq
  %v486 = vshrl.u32 %v485, 7
  %v487 = vsub.s32 %v484, %v486
  %v488 = vrot.slane %v481, %v487
  %v490 = vlaneseq
  %vm491 = vcmp.ge.s32.totalorder %v490, 0
  %vm492 = vcmp.lt.s32.totalorder %v490, 256
  %vm493 = vmand %vm491, %vm492
  %494 = vst.msk [vmem:[%s7] sm:$0x3] %vm493, %v488
  // Predicated region
  $region30: #{_wavenet_forward_impl.1} parent=0 // pred_check
    _
  $region31: #{_wavenet_forward_impl.1} parent=0 // pred_check_branch
    %496 = sbr.rel (0) target = $region33
  $region32: #{_wavenet_forward_impl.1} parent=0 // pred_region
    _
  $region33: #{_wavenet_forward_impl.1} parent=0 // pred_fallthru
    _
  // Predicated region
  $region34: #{_wavenet_forward_impl.1} parent=0 // pred_check
    _
  $region35: #{_wavenet_forward_impl.1} parent=0 // pred_check_branch
    %498 = sbr.rel (0) target = $region37
  $region36: #{_wavenet_forward_impl.1} parent=0 // pred_region
    _
  $region37: #{_wavenet_forward_impl.1} parent=0 // pred_fallthru
    _

</llo_original>
